<compile_context>
chip_gen: v6e
topology: v6e:2x2x1
jax: 0.10.0
libtpu: 0.0.40
codegen_flags: <defaults>
</compile_context>

<pallas_src>
import functools

import jax
import jax.numpy as jnp
from jax.experimental import pallas as pl
from jax.experimental.pallas import tpu as pltpu

_TM_MAX = 1024  # row-tile cap; activation tiles are tiny at these feature sizes


def _round_up(x, m):
    return (x + m - 1) // m * m


def _pick_row_tile(n):
    """Choose (row_tile, num_tiles) for the flattened row count n.

    - n < 512: one full-extent block (always legal, zero padded/OOB rows).
    - n >= 512: tiles of at most _TM_MAX rows, shaped to an even tile count so
      v7x's two TensorCores both get work under the "parallel" row axis.
    """
    if n < 512:
        return n, 1
    tm = min(_TM_MAX, _round_up(n, 8))
    num_tiles = pl.cdiv(n, tm)
    if num_tiles == 1:
        num_tiles = 2          # give both v7x TCs a tile
    elif num_tiles % 2 == 1:
        num_tiles += 1         # even tile count -> balanced 2-TC split
    tm = _round_up(pl.cdiv(n, num_tiles), 8)
    return tm, pl.cdiv(n, tm)


def _mlp_kernel(x_ref, w1_ref, b1_ref, w2_ref, b2_ref, w3_ref, b3_ref, o_ref):
    """Fused 3x (Linear + ReLU) on a [TM, input_size] row tile."""
    # Cast activations to the weight dtype so bf16 params hit the bf16-operand
    # MXU path (no-op for f32 params); accumulate in f32.
    x = x_ref[...].astype(w1_ref.dtype)

    h = jnp.dot(x, w1_ref[...], preferred_element_type=jnp.float32)
    h = jnp.maximum(h + b1_ref[...].astype(jnp.float32), 0.0)

    h = jnp.dot(h.astype(w2_ref.dtype), w2_ref[...],
                preferred_element_type=jnp.float32)
    h = jnp.maximum(h + b2_ref[...].astype(jnp.float32), 0.0)

    h = jnp.dot(h.astype(w3_ref.dtype), w3_ref[...],
                preferred_element_type=jnp.float32)
    h = jnp.maximum(h + b3_ref[...].astype(jnp.float32), 0.0)

    o_ref[...] = h.astype(o_ref.dtype)


@functools.partial(jax.jit, static_argnames=("output_size",))
def encoder_forward(x, params, output_size):
    """JAX wrapper reproducing Encoder.forward semantics.

    x: [..., input_size]  -> returns [..., output_size]
    params: dict with w1,b1,w2,b2,w3,b3 (weights already [in, out]).
    """
    orig_shape = x.shape
    input_size = orig_shape[-1]
    hidden_size = params["w1"].shape[1]

    x2d = x.reshape(-1, input_size)
    n = x2d.shape[0]

    tm, num_tiles = _pick_row_tile(n)

    w1 = params["w1"]
    b1 = params["b1"].reshape(1, hidden_size)
    w2 = params["w2"]
    b2 = params["b2"].reshape(1, hidden_size)
    w3 = params["w3"]
    b3 = params["b3"].reshape(1, output_size)

    # ---- cost hint for the XLA scheduler (true, unpadded work) -------------
    act_itemsize = jnp.dtype(x.dtype).itemsize
    w_itemsize = jnp.dtype(w1.dtype).itemsize
    flops = 2 * n * (input_size * hidden_size
                     + hidden_size * hidden_size
                     + hidden_size * output_size)
    bytes_accessed = (
        act_itemsize * (x2d.size + n * output_size)
        + w_itemsize * (w1.size + w2.size + w3.size + b1.size + b2.size + b3.size))

    out2d = pl.pallas_call(
        _mlp_kernel,
        out_shape=jax.ShapeDtypeStruct((n, output_size), x.dtype),
        grid=(num_tiles,),
        in_specs=[
            # Activation tile marches over rows (double-buffered by Pallas).
            # Block last dim = full input_size -> only true bytes are DMA'd.
            pl.BlockSpec((tm, input_size), lambda i: (i, 0)),
            # Weights / biases: constant block index -> resident in VMEM, no
            # re-DMA across grid steps.  (Single-buffer / feature-tile these
            # only when hidden_size grows large enough to pressure VMEM.)
            pl.BlockSpec((input_size, hidden_size), lambda i: (0, 0)),
            pl.BlockSpec((1, hidden_size), lambda i: (0, 0)),
            pl.BlockSpec((hidden_size, hidden_size), lambda i: (0, 0)),
            pl.BlockSpec((1, hidden_size), lambda i: (0, 0)),
            pl.BlockSpec((hidden_size, output_size), lambda i: (0, 0)),
            pl.BlockSpec((1, output_size), lambda i: (0, 0)),
        ],
        # Output last dim = output_size (no 128-lane inflation, no post-slice).
        out_specs=pl.BlockSpec((tm, output_size), lambda i: (i, 0)),
        compiler_params=pltpu.CompilerParams(
            # Row tiles are independent -> shard across TCs on v7x megacore.
            dimension_semantics=("parallel",),
            vmem_limit_bytes=48 * 1024 * 1024,  # <= v7x 64 MiB physical VMEM
        ),
        cost_estimate=pl.CostEstimate(
            flops=flops, transcendentals=0, bytes_accessed=bytes_accessed),
    )(x2d, w1, b1, w2, b2, w3, b3)

    return out2d.reshape(tuple(orig_shape[:-1]) + (output_size,))


def init_encoder_params(key, input_size, hidden_size, output_size,
                        dtype=jnp.float32):
    """Deterministic init mimicking PyTorch nn.Linear default (U[-1/sqrt(fan_in), +])."""
    ks = jax.random.split(key, 6)

    def linear(kw, kb, fan_in, fan_out):
        bound = 1.0 / jnp.sqrt(jnp.asarray(fan_in, jnp.float32))
        # weight stored as [in, out] (transposed vs. PyTorch's [out, in])
        w = jax.random.uniform(kw, (fan_in, fan_out), dtype, -bound, bound)
        b = jax.random.uniform(kb, (fan_out,), dtype, -bound, bound)
        return w, b

    w1, b1 = linear(ks[0], ks[1], input_size, hidden_size)
    w2, b2 = linear(ks[2], ks[3], hidden_size, hidden_size)
    w3, b3 = linear(ks[4], ks[5], hidden_size, output_size)
    return {"w1": w1, "b1": b1, "w2": w2, "b2": b2, "w3": w3, "b3": b3}


def _reference_forward(x, params, output_size):
    """Pure-JAX reference for correctness checking."""
    s = x.shape
    h = x.reshape(-1, s[-1])
    h = jnp.maximum(h @ params["w1"] + params["b1"], 0.0)
    h = jnp.maximum(h @ params["w2"] + params["b2"], 0.0)
    h = jnp.maximum(h @ params["w3"] + params["b3"], 0.0)
    return h.reshape(tuple(s[:-1]) + (output_size,))


if __name__ == "__main__":
    input_size, hidden_size, output_size = 32, 64, 16

    key = jax.random.PRNGKey(0)
    k_param, k_x1, k_x2 = jax.random.split(key, 3)
    params = init_encoder_params(k_param, input_size, hidden_size, output_size)

    # Small case: single full-extent row block (n = 16).
    x_small = jax.random.normal(k_x1, (2, 8, input_size), dtype=jnp.float32)
    out_small = jax.block_until_ready(encoder_forward(x_small, params, output_size))
    ref_small = _reference_forward(x_small, params, output_size)
    assert out_small.shape == (2, 8, output_size), out_small.shape
    assert jnp.allclose(out_small, ref_small, atol=1e-5, rtol=1e-5), "small mismatch"

    # Larger case: exercises the multi-tile cdiv grid (n = 1200 -> 2 x 600-row
    # tiles), with no row padding and no feature/output lane inflation.
    x_big = jax.random.normal(k_x2, (4, 300, input_size), dtype=jnp.float32)
    out_big = jax.block_until_ready(encoder_forward(x_big, params, output_size))
    ref_big = _reference_forward(x_big, params, output_size)
    assert out_big.shape == (4, 300, output_size), out_big.shape
    assert jnp.allclose(out_big, ref_big, atol=1e-5, rtol=1e-5), "tiled mismatch"

    # bf16-weight path (recommended on v6e/v7x): same kernel; the weight dtype
    # drives the MXU operand dtype and inter-layer activation casts. Looser
    # tolerance vs. the f32 reference due to bf16 weight quantization.
    params_bf16 = jax.tree_util.tree_map(lambda p: p.astype(jnp.bfloat16), params)
    out_bf16 = jax.block_until_ready(encoder_forward(x_big, params_bf16, output_size))
    assert out_bf16.shape == (4, 300, output_size), out_bf16.shape
    assert jnp.allclose(out_bf16, ref_big, atol=1e-1, rtol=1e-1), "bf16 mismatch"

    print("KERNEL_OK")
</pallas_src>

<mosaic_0001>
module attributes {stable_mosaic.version = 11 : i64} {
  func.func @_mlp_kernel(%arg0: i32, %arg1: memref<16x32xf32, #tpu.memory_space<vmem>>, %arg2: memref<32x64xf32, #tpu.memory_space<vmem>>, %arg3: memref<1x64xf32, #tpu.memory_space<vmem>>, %arg4: memref<64x64xf32, #tpu.memory_space<vmem>>, %arg5: memref<1x64xf32, #tpu.memory_space<vmem>>, %arg6: memref<64x16xf32, #tpu.memory_space<vmem>>, %arg7: memref<1x16xf32, #tpu.memory_space<vmem>>, %arg8: memref<16x16xf32, #tpu.memory_space<vmem>>) attributes {dimension_semantics = [#tpu.dimension_semantics<parallel>], iteration_bounds = array<i64: 1>, scalar_prefetch = 0 : i64, scratch_operands = 0 : i64, tpu.core_type = #tpu.core_type<tc>, window_params = [{transform_indices = @transform_0, window_bounds = array<i64: 16, 32>}, {pipeline_mode = #tpu.pipeline_mode<synchronous>, transform_indices = @transform_1, window_bounds = array<i64: 32, 64>}, {pipeline_mode = #tpu.pipeline_mode<synchronous>, transform_indices = @transform_2, window_bounds = array<i64: 1, 64>}, {pipeline_mode = #tpu.pipeline_mode<synchronous>, transform_indices = @transform_3, window_bounds = array<i64: 64, 64>}, {pipeline_mode = #tpu.pipeline_mode<synchronous>, transform_indices = @transform_4, window_bounds = array<i64: 1, 64>}, {pipeline_mode = #tpu.pipeline_mode<synchronous>, transform_indices = @transform_5, window_bounds = array<i64: 64, 16>}, {pipeline_mode = #tpu.pipeline_mode<synchronous>, transform_indices = @transform_6, window_bounds = array<i64: 1, 16>}, {transform_indices = @transform_7, window_bounds = array<i64: 16, 16>}]} {
    %c0 = arith.constant 0 : index
    %c0_0 = arith.constant 0 : index
    %0 = vector.load %arg1[%c0, %c0_0] : memref<16x32xf32, #tpu.memory_space<vmem>>, vector<16x32xf32>
    %c0_1 = arith.constant 0 : index
    %c0_2 = arith.constant 0 : index
    %1 = vector.load %arg2[%c0_1, %c0_2] : memref<32x64xf32, #tpu.memory_space<vmem>>, vector<32x64xf32>
    %cst = arith.constant dense<0.000000e+00> : vector<16x64xf32>
    %2 = tpu.matmul %0, %1, %cst {dimension_numbers = #tpu.dot_dimension_numbers<[1], [0], [0], [1], [0, 0, 1, 1], [], []>} : vector<16x32xf32>, vector<32x64xf32>, vector<16x64xf32> -> vector<16x64xf32>
    %c0_3 = arith.constant 0 : index
    %c0_4 = arith.constant 0 : index
    %3 = vector.load %arg3[%c0_3, %c0_4] : memref<1x64xf32, #tpu.memory_space<vmem>>, vector<1x64xf32>
    %4 = vector.broadcast %3 : vector<1x64xf32> to vector<16x64xf32>
    %5 = arith.addf %2, %4 : vector<16x64xf32>
    %cst_5 = arith.constant 0.000000e+00 : f32
    %6 = vector.broadcast %cst_5 : f32 to vector<16x64xf32>
    %7 = arith.maximumf %5, %6 : vector<16x64xf32>
    %c0_6 = arith.constant 0 : index
    %c0_7 = arith.constant 0 : index
    %8 = vector.load %arg4[%c0_6, %c0_7] : memref<64x64xf32, #tpu.memory_space<vmem>>, vector<64x64xf32>
    %cst_8 = arith.constant dense<0.000000e+00> : vector<16x64xf32>
    %9 = tpu.matmul %7, %8, %cst_8 {dimension_numbers = #tpu.dot_dimension_numbers<[1], [0], [0], [1], [0, 0, 1, 1], [], []>} : vector<16x64xf32>, vector<64x64xf32>, vector<16x64xf32> -> vector<16x64xf32>
    %c0_9 = arith.constant 0 : index
    %c0_10 = arith.constant 0 : index
    %10 = vector.load %arg5[%c0_9, %c0_10] : memref<1x64xf32, #tpu.memory_space<vmem>>, vector<1x64xf32>
    %11 = vector.broadcast %10 : vector<1x64xf32> to vector<16x64xf32>
    %12 = arith.addf %9, %11 : vector<16x64xf32>
    %cst_11 = arith.constant 0.000000e+00 : f32
    %13 = vector.broadcast %cst_11 : f32 to vector<16x64xf32>
    %14 = arith.maximumf %12, %13 : vector<16x64xf32>
    %c0_12 = arith.constant 0 : index
    %c0_13 = arith.constant 0 : index
    %15 = vector.load %arg6[%c0_12, %c0_13] : memref<64x16xf32, #tpu.memory_space<vmem>>, vector<64x16xf32>
    %cst_14 = arith.constant dense<0.000000e+00> : vector<16x16xf32>
    %16 = tpu.matmul %14, %15, %cst_14 {dimension_numbers = #tpu.dot_dimension_numbers<[1], [0], [0], [1], [0, 0, 1, 1], [], []>} : vector<16x64xf32>, vector<64x16xf32>, vector<16x16xf32> -> vector<16x16xf32>
    %c0_15 = arith.constant 0 : index
    %c0_16 = arith.constant 0 : index
    %17 = vector.load %arg7[%c0_15, %c0_16] : memref<1x16xf32, #tpu.memory_space<vmem>>, vector<1x16xf32>
    %18 = vector.broadcast %17 : vector<1x16xf32> to vector<16x16xf32>
    %19 = arith.addf %16, %18 : vector<16x16xf32>
    %cst_17 = arith.constant 0.000000e+00 : f32
    %20 = vector.broadcast %cst_17 : f32 to vector<16x16xf32>
    %21 = arith.maximumf %19, %20 : vector<16x16xf32>
    %c0_18 = arith.constant 0 : index
    %c0_19 = arith.constant 0 : index
    %22 = vector.load %arg8[%c0_18, %c0_19] : memref<16x16xf32, #tpu.memory_space<vmem>>, vector<16x16xf32>
    tpu.vector_store %arg8[%c0_18, %c0_19], %21 {strides = array<i32>} : memref<16x16xf32, #tpu.memory_space<vmem>>, vector<16x16xf32>,
    return
  }
  func.func @transform_0(%arg0: i32) -> (i32, i32) {
    %c0_i32 = arith.constant 0 : i32
    %c0_i32_0 = arith.constant 0 : i32
    return %arg0, %c0_i32 : i32, i32
  }
  func.func @transform_1(%arg0: i32) -> (i32, i32) {
    %c0_i32 = arith.constant 0 : i32
    %c0_i32_0 = arith.constant 0 : i32
    %c0_i32_1 = arith.constant 0 : i32
    return %c0_i32, %c0_i32_0 : i32, i32
  }
  func.func @transform_2(%arg0: i32) -> (i32, i32) {
    %c0_i32 = arith.constant 0 : i32
    %c0_i32_0 = arith.constant 0 : i32
    %c0_i32_1 = arith.constant 0 : i32
    return %c0_i32, %c0_i32_0 : i32, i32
  }
  func.func @transform_3(%arg0: i32) -> (i32, i32) {
    %c0_i32 = arith.constant 0 : i32
    %c0_i32_0 = arith.constant 0 : i32
    %c0_i32_1 = arith.constant 0 : i32
    return %c0_i32, %c0_i32_0 : i32, i32
  }
  func.func @transform_4(%arg0: i32) -> (i32, i32) {
    %c0_i32 = arith.constant 0 : i32
    %c0_i32_0 = arith.constant 0 : i32
    %c0_i32_1 = arith.constant 0 : i32
    return %c0_i32, %c0_i32_0 : i32, i32
  }
  func.func @transform_5(%arg0: i32) -> (i32, i32) {
    %c0_i32 = arith.constant 0 : i32
    %c0_i32_0 = arith.constant 0 : i32
    %c0_i32_1 = arith.constant 0 : i32
    return %c0_i32, %c0_i32_0 : i32, i32
  }
  func.func @transform_6(%arg0: i32) -> (i32, i32) {
    %c0_i32 = arith.constant 0 : i32
    %c0_i32_0 = arith.constant 0 : i32
    %c0_i32_1 = arith.constant 0 : i32
    return %c0_i32, %c0_i32_0 : i32, i32
  }
  func.func @transform_7(%arg0: i32) -> (i32, i32) {
    %c0_i32 = arith.constant 0 : i32
    %c0_i32_0 = arith.constant 0 : i32
    return %arg0, %c0_i32 : i32, i32
  }
}

</mosaic_0001>

<llo_original>
// kernel: encoder_forward.1
$region0: #{encoder_forward.1}
  #allocation0 [shape = 'u32[]', space=smem, size = 0x4, offset = 0x4, fixed_abs, tag = 'smem constant byte address 0x4 - core index']
  #allocation1 [shape = 'u32[144,128]{1,0:T(1,128)}', space=vmem, size = 0x12000, scoped, tag = 'internal scratch']
  %s0 = inlined_call_operand.hbm [shape: f32[16,32], index: 0, kind: input, shape index: {}]
  %s1 = inlined_call_operand.vmem [shape: f32[32,64], index: 1, kind: input, shape index: {}]
  %s2 = inlined_call_operand.hbm [shape: f32[1,64], index: 2, kind: input, shape index: {}]
  %s3 = inlined_call_operand.vmem [shape: f32[64,64], index: 3, kind: input, shape index: {}]
  %s4 = inlined_call_operand.hbm [shape: f32[1,64], index: 4, kind: input, shape index: {}]
  %s5 = inlined_call_operand.vmem [shape: f32[64,16], index: 5, kind: input, shape index: {}]
  %s6 = inlined_call_operand.hbm [shape: f32[1,16], index: 6, kind: input, shape index: {}]
  %s7 = inlined_call_operand.hbm [shape: f32[16,16], index: 7, kind: output, shape index: {}]
  %s8 = sld [smem:[#allocation0]]
  $region54: #{encoder_forward.1} parent=0
    _
  %s10 = ssub.s32 1, %s8
  %s11 = scalar_select 0, %s10, %s8
  $region1: #{encoder_forward.1} parent=0
    #allocation2 [shape = 'u8[8192]{0}', space=vmem, size = 0x2000, scoped, tag = 'input window, operand 0, single buffered']
    #allocation3 [shape = 's32[1]{0}', space=sflag, size = 0x4, scoped, tag = 'scoped memory for encoder_forward.1']
    #allocation4 [shape = 's32[1]{0}', space=sflag, size = 0x4, scoped, tag = 'scoped memory for encoder_forward.1']
    #allocation5 [shape = 'u8[512]{0}', space=vmem, size = 0x400, scoped, tag = 'input window, operand 2, single buffered']
    #allocation6 [shape = 's32[1]{0}', space=sflag, size = 0x4, scoped, tag = 'scoped memory for encoder_forward.1']
    #allocation7 [shape = 'u8[512]{0}', space=vmem, size = 0x400, scoped, tag = 'input window, operand 4, single buffered']
    #allocation8 [shape = 'u8[512]{0}', space=vmem, size = 0x400, scoped, tag = 'input window, operand 6, single buffered']
    #allocation9 [shape = 's32[1]{0}', space=sflag, size = 0x4, scoped, tag = 'scoped memory for encoder_forward.1']
    #allocation10 [shape = 'u8[8192]{0}', space=vmem, size = 0x2000, scoped, tag = 'output window, operand 0, single buffered']
    %12 = vsyncpa [#allocation3], 0
    %13 = vsyncpa [#allocation6], 0
    %14 = vsyncpa [#allocation9], 0
    %15 = vsyncpa [#allocation4], 0
    // Predicated region
    $region2: #{encoder_forward.1} parent=1 // pred_check
      _
    $region3: #{encoder_forward.1} parent=1 // pred_check_branch
      %17 = sbr.rel (0) target = $region5
    $region4: #{encoder_forward.1} parent=1 // pred_region
      %s19 = ssub.s32 256, 256
      %20 = vsyncadd [#allocation3], %s19
      %s21 = sshll.u32 [#allocation2], 4
      %s22 = int_to_ptr.vmem [resolvable:$true] %s21
      %27 = dma.hbm_to_vmem [thread:$0]  %s0, 256, %s22, [#allocation3], 128, 128, 8
    $region5: #{encoder_forward.1} parent=1 // pred_fallthru
      _
    // Predicated region
    $region6: #{encoder_forward.1} parent=1 // pred_check
      _
    $region7: #{encoder_forward.1} parent=1 // pred_check_branch
      %29 = sbr.rel (0) target = $region9
    $region8: #{encoder_forward.1} parent=1 // pred_region
      _
    $region9: #{encoder_forward.1} parent=1 // pred_fallthru
      _
    // Predicated region
    $region10: #{encoder_forward.1} parent=1 // pred_check
      _
    $region11: #{encoder_forward.1} parent=1 // pred_check_branch
      %31 = sbr.rel (0) target = $region13
    $region12: #{encoder_forward.1} parent=1 // pred_region
      %s33 = ssub.s32 16, 16
      %34 = vsyncadd [#allocation6], %s33
      %s36 = sshll.u32 [#allocation5], 4
      %s37 = int_to_ptr.vmem [resolvable:$true] %s36
      %39 = dma.hbm_to_vmem [thread:$0]  %s2, 16, %s37, [#allocation6]
    $region13: #{encoder_forward.1} parent=1 // pred_fallthru
      _
    // Predicated region
    $region14: #{encoder_forward.1} parent=1 // pred_check
      _
    $region15: #{encoder_forward.1} parent=1 // pred_check_branch
      %41 = sbr.rel (0) target = $region17
    $region16: #{encoder_forward.1} parent=1 // pred_region
      _
    $region17: #{encoder_forward.1} parent=1 // pred_fallthru
      _
    // Predicated region
    $region18: #{encoder_forward.1} parent=1 // pred_check
      _
    $region19: #{encoder_forward.1} parent=1 // pred_check_branch
      %43 = sbr.rel (0) target = $region21
    $region20: #{encoder_forward.1} parent=1 // pred_region
      %s45 = ssub.s32 16, 16
      %46 = vsyncadd [#allocation6], %s45
      %s48 = sshll.u32 [#allocation7], 4
      %s49 = int_to_ptr.vmem [resolvable:$true] %s48
      %51 = dma.hbm_to_vmem [thread:$0]  %s4, 16, %s49, [#allocation6]
    $region21: #{encoder_forward.1} parent=1 // pred_fallthru
      _
    // Predicated region
    $region22: #{encoder_forward.1} parent=1 // pred_check
      _
    $region23: #{encoder_forward.1} parent=1 // pred_check_branch
      %53 = sbr.rel (0) target = $region25
    $region24: #{encoder_forward.1} parent=1 // pred_region
      _
    $region25: #{encoder_forward.1} parent=1 // pred_fallthru
      _
    // Predicated region
    $region26: #{encoder_forward.1} parent=1 // pred_check
      _
    $region27: #{encoder_forward.1} parent=1 // pred_check_branch
      %55 = sbr.rel (0) target = $region29
    $region28: #{encoder_forward.1} parent=1 // pred_region
      %s57 = ssub.s32 16, 16
      %58 = vsyncadd [#allocation9], %s57
      %s60 = sshll.u32 [#allocation8], 4
      %s61 = int_to_ptr.vmem [resolvable:$true] %s60
      %63 = dma.hbm_to_vmem [thread:$0]  %s6, 16, %s61, [#allocation9]
    $region29: #{encoder_forward.1} parent=1 // pred_fallthru
      _
    // Predicated region
    $region30: #{encoder_forward.1} parent=1 // pred_check
      _
    $region31: #{encoder_forward.1} parent=1 // pred_check_branch
      %65 = sbr.rel (0) target = $region33
    $region32: #{encoder_forward.1} parent=1 // pred_region
      %66 = dma.done [#allocation3], 256
    $region33: #{encoder_forward.1} parent=1 // pred_fallthru
      _
    // Predicated region
    $region34: #{encoder_forward.1} parent=1 // pred_check
      _
    $region35: #{encoder_forward.1} parent=1 // pred_check_branch
      %68 = sbr.rel (0) target = $region37
    $region36: #{encoder_forward.1} parent=1 // pred_region
      %69 = dma.done [#allocation6], 16
    $region37: #{encoder_forward.1} parent=1 // pred_fallthru
      _
    // Predicated region
    $region38: #{encoder_forward.1} parent=1 // pred_check
      _
    $region39: #{encoder_forward.1} parent=1 // pred_check_branch
      %71 = sbr.rel (0) target = $region41
    $region40: #{encoder_forward.1} parent=1 // pred_region
      %72 = dma.done [#allocation6], 16
    $region41: #{encoder_forward.1} parent=1 // pred_fallthru
      _
    // Predicated region
    $region42: #{encoder_forward.1} parent=1 // pred_check
      _
    $region43: #{encoder_forward.1} parent=1 // pred_check_branch
      %74 = sbr.rel (0) target = $region45
    $region44: #{encoder_forward.1} parent=1 // pred_region
      %75 = dma.done [#allocation9], 16
    $region45: #{encoder_forward.1} parent=1 // pred_fallthru
      _
    %v76 = vld [vmem:[#allocation2] sm:$0xff]
    %v77 = vld [vmem:[#allocation2 + $0x8] sm:$0xff]
    %v78 = vld [vmem:[%s1] sm:$0xff]
    %v79 = vld [vmem:[%s1 + $0x8] sm:$0xff]
    %v80 = vld [vmem:[%s1 + $0x10] sm:$0xff]
    %v81 = vld [vmem:[%s1 + $0x18] sm:$0xff]
    %v82 = vld [vmem:[#allocation5] sm:$0x1]
    %v84 = vlaneseq
    %v85 = vshrl.u32 %v84, 7
    %v86 = vsub.s32 0, %v85
    %v87 = vrot.slane %v82, %v86
    %vm89 = vcmask 261120
    %v91 = vsel %vm89, %v76, 0
    %v94 = vsel %vm89, %v77, 0
    %96 = vmatprep.subr.mxu0 0.0
    %97 = vmatpush1.msra.mxu0 0.0
    %98 = vmatprep.subr.mxu0 0.0
    %99 = vmatpush1.msra.mxu0 0.0
    %100 = vmatprep.subr.mxu0 0.0
    %101 = vmatpush1.msra.mxu0 0.0
    %102 = vmatprep.subr.mxu0 0.0
    %103 = vmatpush1.msra.mxu0 0.0
    %104 = vmatprep.subr.mxu0 0.0
    %105 = vmatpush1.msra.mxu0 0.0
    %106 = vmatprep.subr.mxu0 0.0
    %107 = vmatpush1.msra.mxu0 0.0
    %108 = vmatprep.subr.mxu0 0.0
    %109 = vmatpush1.msra.mxu0 0.0
    %110 = vmatprep.subr.mxu0 0.0
    %111 = vmatpush1.msra.mxu0 0.0
    %112 = vmatprep.subr.mxu0 0.0
    %113 = vmatpush1.msra.mxu0 0.0
    %114 = vmatprep.subr.mxu0 0.0
    %115 = vmatpush1.msra.mxu0 0.0
    %116 = vmatprep.subr.mxu0 0.0
    %117 = vmatpush1.msra.mxu0 0.0
    %118 = vmatprep.subr.mxu0 0.0
    %119 = vmatpush1.msra.mxu0 0.0
    %120 = vmatprep.subr.mxu0 0.0
    %121 = vmatpush1.msra.mxu0 %v81
    %122 = vmatprep.subr.mxu0 0.0
    %123 = vmatpush1.msra.mxu0 %v80
    %124 = vmatprep.subr.mxu0 0.0
    %125 = vmatpush1.msra.mxu0 %v79
    %126 = vmatprep.subr.mxu0 0.0
    %127 = vmatpush1.msra.mxu0 %v78
    %128 = vmatprep.subr.mxu0 0.0
    %129 = vmatpush2.msra.mxu0 0.0
    %130 = vmatprep.subr.mxu0 0.0
    %131 = vmatpush2.msra.mxu0 0.0
    %132 = vmatprep.subr.mxu0 0.0
    %133 = vmatpush2.msra.mxu0 0.0
    %134 = vmatprep.subr.mxu0 0.0
    %135 = vmatpush2.msra.mxu0 0.0
    %136 = vmatprep.subr.mxu0 0.0
    %137 = vmatpush2.msra.mxu0 0.0
    %138 = vmatprep.subr.mxu0 0.0
    %139 = vmatpush2.msra.mxu0 0.0
    %140 = vmatprep.subr.mxu0 0.0
    %141 = vmatpush2.msra.mxu0 0.0
    %142 = vmatprep.subr.mxu0 0.0
    %143 = vmatpush2.msra.mxu0 0.0
    %144 = vmatprep.subr.mxu0 0.0
    %145 = vmatpush2.msra.mxu0 0.0
    %146 = vmatprep.subr.mxu0 0.0
    %147 = vmatpush2.msra.mxu0 0.0
    %148 = vmatprep.subr.mxu0 0.0
    %149 = vmatpush2.msra.mxu0 0.0
    %150 = vmatprep.subr.mxu0 0.0
    %151 = vmatpush2.msra.mxu0 0.0
    %152 = vmatprep.subr.mxu0 0.0
    %153 = vmatpush2.msra.mxu0 0.0
    %154 = vmatprep.subr.mxu0 0.0
    %155 = vmatpush2.msra.mxu0 0.0
    %156 = vmatprep.subr.mxu0 0.0
    %157 = vmatpush2.msra.mxu0 0.0
    %158 = vmatprep.subr.mxu0 0.0
    %159 = vmatpush2.msra.mxu0 0.0
    %160 = vmatprep.mubr.f32.mxu0 0.0
    %161 = vmatmul.mubr.f32.gmra.mxu0 %v91
    %v162 = vpop.f32.mrf.mxu0
    %v163 = vadd.f32 %v87, %v162
    %v164 = vpop.f32.mrf.mxu0
    %165 = vmatprep.mubr.f32.mxu0 0.0
    %166 = vmatmul.mubr.f32.gmra.mxu0 %v94
    %v167 = vpop.f32.mrf.mxu0
    %v168 = vadd.f32 %v87, %v167
    %v169 = vpop.f32.mrf.mxu0
    %170 = vdwg.mxu0
    %v171 = vmax.f32 %v163, 0.0
    %v172 = vmax.f32 %v168, 0.0
    %v173 = vld [vmem:[%s3] sm:$0xff]
    %v174 = vld [vmem:[%s3 + $0x8] sm:$0xff]
    %v175 = vld [vmem:[%s3 + $0x10] sm:$0xff]
    %v176 = vld [vmem:[%s3 + $0x18] sm:$0xff]
    %v177 = vld [vmem:[%s3 + $0x20] sm:$0xff]
    %v178 = vld [vmem:[%s3 + $0x28] sm:$0xff]
    %v179 = vld [vmem:[%s3 + $0x30] sm:$0xff]
    %v180 = vld [vmem:[%s3 + $0x38] sm:$0xff]
    %v181 = vld [vmem:[#allocation7] sm:$0x1]
    %v183 = vlaneseq
    %v184 = vshrl.u32 %v183, 7
    %v185 = vsub.s32 0, %v184
    %v186 = vrot.slane %v181, %v185
    %vm188 = vcmask 523264
    %v190 = vsel %vm188, %v171, 0
    %v193 = vsel %vm188, %v172, 0
    %195 = vmatprep.subr.mxu0 0.0
    %196 = vmatpush1.msra.mxu0 0.0
    %197 = vmatprep.subr.mxu0 0.0
    %198 = vmatpush1.msra.mxu0 0.0
    %199 = vmatprep.subr.mxu0 0.0
    %200 = vmatpush1.msra.mxu0 0.0
    %201 = vmatprep.subr.mxu0 0.0
    %202 = vmatpush1.msra.mxu0 0.0
    %203 = vmatprep.subr.mxu0 0.0
    %204 = vmatpush1.msra.mxu0 0.0
    %205 = vmatprep.subr.mxu0 0.0
    %206 = vmatpush1.msra.mxu0 0.0
    %207 = vmatprep.subr.mxu0 0.0
    %208 = vmatpush1.msra.mxu0 0.0
    %209 = vmatprep.subr.mxu0 0.0
    %210 = vmatpush1.msra.mxu0 0.0
    %211 = vmatprep.subr.mxu0 0.0
    %212 = vmatpush1.msra.mxu0 %v180
    %213 = vmatprep.subr.mxu0 0.0
    %214 = vmatpush1.msra.mxu0 %v179
    %215 = vmatprep.subr.mxu0 0.0
    %216 = vmatpush1.msra.mxu0 %v178
    %217 = vmatprep.subr.mxu0 0.0
    %218 = vmatpush1.msra.mxu0 %v177
    %219 = vmatprep.subr.mxu0 0.0
    %220 = vmatpush1.msra.mxu0 %v176
    %221 = vmatprep.subr.mxu0 0.0
    %222 = vmatpush1.msra.mxu0 %v175
    %223 = vmatprep.subr.mxu0 0.0
    %224 = vmatpush1.msra.mxu0 %v174
    %225 = vmatprep.subr.mxu0 0.0
    %226 = vmatpush1.msra.mxu0 %v173
    %227 = vmatprep.subr.mxu0 0.0
    %228 = vmatpush2.msra.mxu0 0.0
    %229 = vmatprep.subr.mxu0 0.0
    %230 = vmatpush2.msra.mxu0 0.0
    %231 = vmatprep.subr.mxu0 0.0
    %232 = vmatpush2.msra.mxu0 0.0
    %233 = vmatprep.subr.mxu0 0.0
    %234 = vmatpush2.msra.mxu0 0.0
    %235 = vmatprep.subr.mxu0 0.0
    %236 = vmatpush2.msra.mxu0 0.0
    %237 = vmatprep.subr.mxu0 0.0
    %238 = vmatpush2.msra.mxu0 0.0
    %239 = vmatprep.subr.mxu0 0.0
    %240 = vmatpush2.msra.mxu0 0.0
    %241 = vmatprep.subr.mxu0 0.0
    %242 = vmatpush2.msra.mxu0 0.0
    %243 = vmatprep.subr.mxu0 0.0
    %244 = vmatpush2.msra.mxu0 0.0
    %245 = vmatprep.subr.mxu0 0.0
    %246 = vmatpush2.msra.mxu0 0.0
    %247 = vmatprep.subr.mxu0 0.0
    %248 = vmatpush2.msra.mxu0 0.0
    %249 = vmatprep.subr.mxu0 0.0
    %250 = vmatpush2.msra.mxu0 0.0
    %251 = vmatprep.subr.mxu0 0.0
    %252 = vmatpush2.msra.mxu0 0.0
    %253 = vmatprep.subr.mxu0 0.0
    %254 = vmatpush2.msra.mxu0 0.0
    %255 = vmatprep.subr.mxu0 0.0
    %256 = vmatpush2.msra.mxu0 0.0
    %257 = vmatprep.subr.mxu0 0.0
    %258 = vmatpush2.msra.mxu0 0.0
    %259 = vmatprep.mubr.f32.mxu0 0.0
    %260 = vmatmul.mubr.f32.gmra.mxu0 %v190
    %v261 = vpop.f32.mrf.mxu0
    %v262 = vadd.f32 %v186, %v261
    %v263 = vpop.f32.mrf.mxu0
    %264 = vmatprep.mubr.f32.mxu0 0.0
    %265 = vmatmul.mubr.f32.gmra.mxu0 %v193
    %v266 = vpop.f32.mrf.mxu0
    %v267 = vadd.f32 %v186, %v266
    %v268 = vpop.f32.mrf.mxu0
    %269 = vdwg.mxu0
    %v270 = vmax.f32 %v262, 0.0
    %v271 = vmax.f32 %v267, 0.0
    %v272 = vld [vmem:[%s5] sm:$0xff]
    %v273 = vld [vmem:[%s5 + $0x8] sm:$0xff]
    %v274 = vld [vmem:[%s5 + $0x10] sm:$0xff]
    %v275 = vld [vmem:[%s5 + $0x18] sm:$0xff]
    %v276 = vld [vmem:[%s5 + $0x20] sm:$0xff]
    %v277 = vld [vmem:[%s5 + $0x28] sm:$0xff]
    %v278 = vld [vmem:[%s5 + $0x30] sm:$0xff]
    %v279 = vld [vmem:[%s5 + $0x38] sm:$0xff]
    %v280 = vld [vmem:[#allocation8] sm:$0x1]
    %v282 = vlaneseq
    %v283 = vshrl.u32 %v282, 7
    %v284 = vsub.s32 0, %v283
    %v285 = vrot.slane %v280, %v284
    %v288 = vsel %vm188, %v270, 0
    %v291 = vsel %vm188, %v271, 0
    %293 = vmatprep.subr.mxu0 0.0
    %294 = vmatpush1.msra.mxu0 0.0
    %295 = vmatprep.subr.mxu0 0.0
    %296 = vmatpush1.msra.mxu0 0.0
    %297 = vmatprep.subr.mxu0 0.0
    %298 = vmatpush1.msra.mxu0 0.0
    %299 = vmatprep.subr.mxu0 0.0
    %300 = vmatpush1.msra.mxu0 0.0
    %301 = vmatprep.subr.mxu0 0.0
    %302 = vmatpush1.msra.mxu0 0.0
    %303 = vmatprep.subr.mxu0 0.0
    %304 = vmatpush1.msra.mxu0 0.0
    %305 = vmatprep.subr.mxu0 0.0
    %306 = vmatpush1.msra.mxu0 0.0
    %307 = vmatprep.subr.mxu0 0.0
    %308 = vmatpush1.msra.mxu0 0.0
    %309 = vmatprep.subr.mxu0 0.0
    %310 = vmatpush1.msra.mxu0 %v279
    %311 = vmatprep.subr.mxu0 0.0
    %312 = vmatpush1.msra.mxu0 %v278
    %313 = vmatprep.subr.mxu0 0.0
    %314 = vmatpush1.msra.mxu0 %v277
    %315 = vmatprep.subr.mxu0 0.0
    %316 = vmatpush1.msra.mxu0 %v276
    %317 = vmatprep.subr.mxu0 0.0
    %318 = vmatpush1.msra.mxu0 %v275
    %319 = vmatprep.subr.mxu0 0.0
    %320 = vmatpush1.msra.mxu0 %v274
    %321 = vmatprep.subr.mxu0 0.0
    %322 = vmatpush1.msra.mxu0 %v273
    %323 = vmatprep.subr.mxu0 0.0
    %324 = vmatpush1.msra.mxu0 %v272
    %325 = vmatprep.subr.mxu0 0.0
    %326 = vmatpush2.msra.mxu0 0.0
    %327 = vmatprep.subr.mxu0 0.0
    %328 = vmatpush2.msra.mxu0 0.0
    %329 = vmatprep.subr.mxu0 0.0
    %330 = vmatpush2.msra.mxu0 0.0
    %331 = vmatprep.subr.mxu0 0.0
    %332 = vmatpush2.msra.mxu0 0.0
    %333 = vmatprep.subr.mxu0 0.0
    %334 = vmatpush2.msra.mxu0 0.0
    %335 = vmatprep.subr.mxu0 0.0
    %336 = vmatpush2.msra.mxu0 0.0
    %337 = vmatprep.subr.mxu0 0.0
    %338 = vmatpush2.msra.mxu0 0.0
    %339 = vmatprep.subr.mxu0 0.0
    %340 = vmatpush2.msra.mxu0 0.0
    %341 = vmatprep.subr.mxu0 0.0
    %342 = vmatpush2.msra.mxu0 0.0
    %343 = vmatprep.subr.mxu0 0.0
    %344 = vmatpush2.msra.mxu0 0.0
    %345 = vmatprep.subr.mxu0 0.0
    %346 = vmatpush2.msra.mxu0 0.0
    %347 = vmatprep.subr.mxu0 0.0
    %348 = vmatpush2.msra.mxu0 0.0
    %349 = vmatprep.subr.mxu0 0.0
    %350 = vmatpush2.msra.mxu0 0.0
    %351 = vmatprep.subr.mxu0 0.0
    %352 = vmatpush2.msra.mxu0 0.0
    %353 = vmatprep.subr.mxu0 0.0
    %354 = vmatpush2.msra.mxu0 0.0
    %355 = vmatprep.subr.mxu0 0.0
    %356 = vmatpush2.msra.mxu0 0.0
    %357 = vmatprep.mubr.f32.mxu0 0.0
    %358 = vmatmul.mubr.f32.gmra.mxu0 %v288
    %v359 = vpop.f32.mrf.mxu0
    %v360 = vadd.f32 %v285, %v359
    %v361 = vpop.f32.mrf.mxu0
    %362 = vmatprep.mubr.f32.mxu0 0.0
    %363 = vmatmul.mubr.f32.gmra.mxu0 %v291
    %v364 = vpop.f32.mrf.mxu0
    %v365 = vadd.f32 %v285, %v364
    %v366 = vpop.f32.mrf.mxu0
    %367 = vdwg.mxu0
    %v368 = vmax.f32 %v360, 0.0
    %v369 = vmax.f32 %v365, 0.0
    %vm370 = vcmask 130048
    %371 = vst.msk [vmem:[#allocation10] sm:$0xff] %vm370, %v368
    %372 = vst.msk [vmem:[#allocation10 + $0x8] sm:$0xff] %vm370, %v369
    // Predicated region
    $region46: #{encoder_forward.1} parent=1 // pred_check
      _
    $region47: #{encoder_forward.1} parent=1 // pred_check_branch
      %374 = sbr.rel (0) target = $region49
    $region48: #{encoder_forward.1} parent=1 // pred_region
      %s376 = ssub.s32 256, 256
      %377 = vsyncadd [#allocation4], %s376
      %s378 = sshll.u32 [#allocation10], 4
      %s379 = int_to_ptr.vmem [resolvable:$true] %s378
      %384 = dma.vmem_to_hbm [thread:$0]  %s379, 256, %s7, [#allocation4], 128, 128, 8
    $region49: #{encoder_forward.1} parent=1 // pred_fallthru
      _
    // Predicated region
    $region50: #{encoder_forward.1} parent=1 // pred_check
      _
    $region51: #{encoder_forward.1} parent=1 // pred_check_branch
      %386 = sbr.rel (0) target = $region53
    $region52: #{encoder_forward.1} parent=1 // pred_region
      %387 = dma.done [#allocation4], 256
    $region53: #{encoder_forward.1} parent=1 // pred_fallthru
      _
    %388 = vsyncpa [#allocation3], 1
    %389 = vsyncpa [#allocation6], 1
    %390 = vsyncpa [#allocation9], 1
    %391 = vsyncpa [#allocation4], 1

</llo_original>
